<compile_context>
chip_gen: v7x
topology: tpu7x:2x2x1
jax: 0.10.0
libtpu: 0.0.40
codegen_flags: <defaults>
</compile_context>

<pallas_src>
import math

import jax
import jax.numpy as jnp
from jax.experimental import pallas as pl
from jax.experimental.pallas import tpu as pltpu

PADDING = 3
LANE = 128          # pad every matmul output N to a multiple of the lane width
SUBPACK = 16        # bf16 sublane packing: pad M / K to multiples of 16


def _round_up(x, m):
    return ((x + m - 1) // m) * m


def _vmem_limit_bytes():
    """Generation-aware VMEM limit: ~75% of physical, clamped to [32, 96] MiB
    (-> 48 MiB on v7x's 64 MiB, 96 MiB on v5e/v6e's 128 MiB)."""
    cap = 64 * 1024 * 1024                        # conservative fallback (v7x)
    try:
        cap = int(getattr(pltpu.get_tpu_info(), "vmem_capacity_bytes", cap))
    except Exception:
        pass
    return max(32 * 1024 * 1024, min(3 * cap // 4, 96 * 1024 * 1024))


VMEM_LIMIT_BYTES = _vmem_limit_bytes()


def _choose_tile_m(m, row_bytes_pipelined, resident_bytes, *,
                   vmem_limit=VMEM_LIMIT_BYTES, min_split=512):
    """Pad the row count and pick a row-tile size from the VMEM budget.

    row_bytes_pipelined: double-buffered bytes per output row (inputs + output)
    resident_bytes:      weights/biases that stay resident across the grid
    """
    m_pad = _round_up(m, SUBPACK)
    budget = max(vmem_limit - resident_bytes, 1 << 20) // 2   # keep headroom
    max_tile = max(SUBPACK,
                   (budget // max(row_bytes_pipelined, 1)) // SUBPACK * SUBPACK)
    tile = min(m_pad, max_tile)
    # Ensure >=2 tiles when there is real work so the "parallel" grid axis can
    # shard across v7x's two TensorCores (neutral on v5e/v6e).
    if tile >= m_pad and m_pad >= 2 * min_split:
        tile = _round_up((m_pad + 1) // 2, SUBPACK)
    m_pad = _round_up(m_pad, tile)
    return m_pad, tile


# ---------------------------------------------------------------------------
# Kernel A: fused conv (im2col matmul) + bias + ReLU + maxpool.
#   One stacked (n_phase, tile_m, k) bf16 input ref; max(relu(d_i+b)) ==
#   relu(max(d_i)+b), so we max the raw accumulators and apply bias/ReLU once.
# ---------------------------------------------------------------------------
def _conv_relu_pool_kernel(p_ref, w_ref, b_ref, o_ref):
    w = w_ref[...]
    acc = jnp.dot(p_ref[0], w, preferred_element_type=jnp.float32)
    for ph in range(1, p_ref.shape[0]):
        acc = jnp.maximum(
            acc, jnp.dot(p_ref[ph], w, preferred_element_type=jnp.float32))
    acc = jnp.maximum(acc + b_ref[...], 0.0)       # f32 epilogue (v5e-safe)
    o_ref[...] = acc.astype(o_ref.dtype)           # bf16 store


def conv_relu_pool_call(phases, w_pad, b_pad, *, tile_m):
    n_win, m_pad, k_pad = phases.shape
    n_pad = w_pad.shape[1]
    grid = (m_pad // tile_m,)
    flops = 2 * n_win * m_pad * k_pad * n_pad
    bytes_accessed = (n_win * m_pad * k_pad * 2 + k_pad * n_pad * 2
                      + n_pad * 4 + m_pad * n_pad * 2)
    return pl.pallas_call(
        _conv_relu_pool_kernel,
        out_shape=jax.ShapeDtypeStruct((m_pad, n_pad), jnp.bfloat16),
        grid=grid,
        in_specs=[
            pl.BlockSpec((n_win, tile_m, k_pad), lambda i: (0, i, 0)),
            pl.BlockSpec((k_pad, n_pad), lambda i: (0, 0)),
            pl.BlockSpec((1, n_pad), lambda i: (0, 0)),
        ],
        out_specs=pl.BlockSpec((tile_m, n_pad), lambda i: (i, 0)),
        compiler_params=pltpu.CompilerParams(
            dimension_semantics=("parallel",),
            vmem_limit_bytes=VMEM_LIMIT_BYTES),
        cost_estimate=pl.CostEstimate(
            flops=flops, transcendentals=0, bytes_accessed=bytes_accessed),
    )(phases, w_pad, b_pad)


# ---------------------------------------------------------------------------
# Kernel B: conv2+ReLU+pool2 (block-diagonal weight over pooled positions)
#           fused with the full FC stack.  Everything stays in VMEM.
# ---------------------------------------------------------------------------
def _conv_fc_fused_kernel(p_ref, wbd_ref, bbd_ref, w0_ref, b0_ref,
                          w1_ref, b1_ref, w2_ref, b2_ref, o_ref):
    wbd = wbd_ref[...]
    acc = jnp.dot(p_ref[0], wbd, preferred_element_type=jnp.float32)
    for ph in range(1, p_ref.shape[0]):
        acc = jnp.maximum(
            acc, jnp.dot(p_ref[ph], wbd, preferred_element_type=jnp.float32))
    # conv2 bias + ReLU; columns are already in (h, w, c) flatten order.
    h = jnp.maximum(acc + bbd_ref[...], 0.0)
    h = jnp.dot(h.astype(w0_ref.dtype), w0_ref[...],
                preferred_element_type=jnp.float32)
    h = jnp.maximum(h + b0_ref[...], 0.0)
    h = jnp.dot(h.astype(w1_ref.dtype), w1_ref[...],
                preferred_element_type=jnp.float32)
    h = jnp.maximum(h + b1_ref[...], 0.0)
    h = jnp.dot(h.astype(w2_ref.dtype), w2_ref[...],
                preferred_element_type=jnp.float32)
    o_ref[...] = (h + b2_ref[...]).astype(o_ref.dtype)


def conv_fc_fused_call(phases, params, *, tile_m):
    n_win, m_pad, kbd_pad = phases.shape
    wbd, bbd = params["conv1_wbd"], params["conv1_bbd"]
    w0, b0 = params["fc0_wp"], params["fc0_b"]
    w1, b1 = params["fc1_wp"], params["fc1_b"]
    w2, b2 = params["fc2_wp"], params["fc2_b"]
    nbd, h0, h1, h2 = wbd.shape[1], w0.shape[1], w1.shape[1], w2.shape[1]
    grid = (m_pad // tile_m,)
    flops = 2 * m_pad * (n_win * kbd_pad * nbd + nbd * h0 + h0 * h1 + h1 * h2)
    bytes_accessed = (n_win * m_pad * kbd_pad * 2 + kbd_pad * nbd * 2
                      + nbd * h0 * 2 + h0 * h1 * 2 + h1 * h2 * 2
                      + m_pad * h2 * 4)
    return pl.pallas_call(
        _conv_fc_fused_kernel,
        out_shape=jax.ShapeDtypeStruct((m_pad, h2), jnp.float32),
        grid=grid,
        in_specs=[
            pl.BlockSpec((n_win, tile_m, kbd_pad), lambda i: (0, i, 0)),
            pl.BlockSpec((kbd_pad, nbd), lambda i: (0, 0)),
            pl.BlockSpec((1, nbd), lambda i: (0, 0)),
            pl.BlockSpec((nbd, h0), lambda i: (0, 0)),
            pl.BlockSpec((1, h0), lambda i: (0, 0)),
            pl.BlockSpec((h0, h1), lambda i: (0, 0)),
            pl.BlockSpec((1, h1), lambda i: (0, 0)),
            pl.BlockSpec((h1, h2), lambda i: (0, 0)),
            pl.BlockSpec((1, h2), lambda i: (0, 0)),
        ],
        out_specs=pl.BlockSpec((tile_m, h2), lambda i: (i, 0)),
        compiler_params=pltpu.CompilerParams(
            dimension_semantics=("parallel",),
            vmem_limit_bytes=VMEM_LIMIT_BYTES),
        cost_estimate=pl.CostEstimate(
            flops=flops, transcendentals=0, bytes_accessed=bytes_accessed),
    )(phases, wbd, bbd, w0, b0, w1, b1, w2, b2)


# ---------------------------------------------------------------------------
# Layout plumbing (im2col / pool-phase gather) — plain JAX/XLA, all bf16.
# ---------------------------------------------------------------------------
def _pool_phase_patches(x_nhwc, *, kc, sc, kp, sp):
    """Returns (phases, ph, pw): phases has shape (kp*kp, B, ph, pw, kc*kc*C)
    with features in (kh, kw, c) order, same dtype as x (bf16)."""
    bsz, h, w, _ = x_nhwc.shape
    xp = jnp.pad(x_nhwc,
                 ((0, 0), (PADDING, PADDING), (PADDING, PADDING), (0, 0)))
    hp, wp = h + 2 * PADDING, w + 2 * PADDING
    oh = (hp - kc) // sc + 1
    ow = (wp - kc) // sc + 1
    ph = (oh - kp) // sp + 1
    pw = (ow - kp) // sp + 1
    cols = []
    for i in range(kc):
        for j in range(kc):
            cols.append(xp[:, i:i + sc * oh:sc, j:j + sc * ow:sc, :])
    pf = jnp.stack(cols, axis=3).reshape(bsz, oh, ow, -1)
    phases = []
    for pi in range(kp):
        for pj in range(kp):
            phases.append(pf[:, pi:pi + sp * ph:sp, pj:pj + sp * pw:sp, :])
    return jnp.stack(phases, axis=0), ph, pw


# ---------------------------------------------------------------------------
# Parameter init (Xavier-uniform, same fan rule as CNN.initialize); all
# kernel-side padding / layout transforms are applied once here.
# ---------------------------------------------------------------------------
def init_cnn_params(key, *, channels, shapes, kernel_size_conv, size,
                    stride_size_conv, kernel_size_pool, stride_size_pool):
    kc = kernel_size_conv
    keys = jax.random.split(key, 5)
    params = {}

    # size bookkeeping mirrors CNN.__init__
    size1 = (size - kc + 2 * PADDING) // stride_size_conv + 1
    size2 = (size1 - kernel_size_pool) // stride_size_pool + 1
    size3 = (size2 - kc + 2 * PADDING) // stride_size_conv + 1
    size4 = (size3 - kernel_size_pool) // stride_size_pool + 1
    s = channels[2] * size4 * size4
    n_pos = size4 * size4

    # ---- conv1: (kh,kw,cin,cout) -> padded (K, 128) bf16 -------------------
    cin, cout = channels[0], channels[1]
    a = math.sqrt(6.0 / (cin * kc * kc + cout * kc * kc))
    w = jax.random.uniform(keys[0], (kc, kc, cin, cout), jnp.float32,
                           minval=-a, maxval=a)
    k = kc * kc * cin
    k_pad = _round_up(k, SUBPACK)
    n_pad = _round_up(cout, LANE)
    w_pad = jnp.zeros((k_pad, n_pad), jnp.float32)
    w_pad = w_pad.at[:k, :cout].set(w.reshape(k, cout))
    params["conv0_wp"] = w_pad.astype(jnp.bfloat16)
    params["conv0_b"] = jnp.zeros((1, n_pad), jnp.float32)   # torch zeroes bias

    # ---- conv2: block-diagonal over the size4*size4 pooled positions -------
    # wbd[p*k2+f, p*cout+c] = w2[f, c]  =>  the conv2+pool GEMM output comes
    # out already flattened in (h, w, c) order, directly consumable by fc0.
    cin, cout = channels[1], channels[2]
    a = math.sqrt(6.0 / (cin * kc * kc + cout * kc * kc))
    w = jax.random.uniform(keys[1], (kc, kc, cin, cout), jnp.float32,
                           minval=-a, maxval=a)
    k2 = kc * kc * cin
    wbd = jnp.kron(jnp.eye(n_pos, dtype=jnp.float32), w.reshape(k2, cout))
    kbd, nbd = n_pos * k2, n_pos * cout          # nbd == s
    kbd_pad = _round_up(kbd, LANE)               # lane-aligned patch rows
    nbd_pad = _round_up(nbd, LANE)
    wbd_pad = jnp.zeros((kbd_pad, nbd_pad), jnp.float32)
    wbd_pad = wbd_pad.at[:kbd, :nbd].set(wbd)
    params["conv1_wbd"] = wbd_pad.astype(jnp.bfloat16)
    # conv2 bias tiled over pooled positions (zero per torch init).
    params["conv1_bbd"] = jnp.zeros((1, nbd_pad), jnp.float32)

    # ---- fc stack -----------------------------------------------------------
    h_prev_pad = nbd_pad      # fc0 consumes the fused conv2+pool output (HWC)
    k_valid_prev = s
    fc_dims = [(s, shapes[0]), (shapes[0], shapes[1]), (shapes[1], shapes[2])]
    for idx, (nin, nout) in enumerate(fc_dims):
        a = math.sqrt(6.0 / (nin + nout))
        w = jax.random.uniform(keys[2 + idx], (nin, nout), jnp.float32,
                               minval=-a, maxval=a)
        if idx == 0:
            # fold torch's CHW flatten order into the HWC order used in-kernel
            w = (w.reshape(channels[2], size4, size4, nout)
                  .transpose(1, 2, 0, 3).reshape(nin, nout))
        n_pad = _round_up(nout, LANE)
        w_pad = jnp.zeros((h_prev_pad, n_pad), jnp.float32)
        w_pad = w_pad.at[:k_valid_prev, :nout].set(w)
        params[f"fc{idx}_wp"] = w_pad.astype(jnp.bfloat16)
        params[f"fc{idx}_b"] = jnp.zeros((1, n_pad), jnp.float32)
        h_prev_pad = n_pad
        k_valid_prev = nout
    return params, s


# ---------------------------------------------------------------------------
# CNN forward (mirrors the PyTorch CNN.forward) — two pallas_calls total.
# ---------------------------------------------------------------------------
def cnn_forward(params, x_nchw, *, channels, shapes, kernel_size_conv,
                stride_size_conv, kernel_size_pool, stride_size_pool):
    kc, sc = kernel_size_conv, stride_size_conv
    kp, sp = kernel_size_pool, stride_size_pool
    bsz = x_nchw.shape[0]
    # NCHW -> NHWC, bf16 BEFORE im2col so the expanded patches are half-width.
    x = jnp.transpose(x_nchw, (0, 2, 3, 1)).astype(jnp.bfloat16)

    # --- stage 1: conv1 + ReLU + pool1 (Kernel A) ---------------------------
    phases, ph1, pw1 = _pool_phase_patches(x, kc=kc, sc=sc, kp=kp, sp=sp)
    n_win, k1 = phases.shape[0], phases.shape[-1]
    m1 = bsz * ph1 * pw1
    phases = phases.reshape(n_win, m1, k1)
    w1p, b1p = params["conv0_wp"], params["conv0_b"]
    k1_pad, n1_pad = w1p.shape
    row_bytes = 2 * (n_win * k1_pad * 2) + 2 * (n1_pad * 2)   # dbl-buffered
    resident = k1_pad * n1_pad * 2 + n1_pad * 4
    m1_pad, tile_m1 = _choose_tile_m(m1, row_bytes, resident)
    phases = jnp.pad(phases, ((0, 0), (0, m1_pad - m1), (0, k1_pad - k1)))
    y = conv_relu_pool_call(phases, w1p, b1p, tile_m=tile_m1)   # bf16
    y = y[:m1, :channels[1]].reshape(bsz, ph1, pw1, channels[1])

    # --- stage 2: conv2+ReLU+pool2 fused with fc0..fc2 (Kernel B) -----------
    phases, ph2, pw2 = _pool_phase_patches(y, kc=kc, sc=sc, kp=kp, sp=sp)
    k2 = phases.shape[-1]
    kbd = ph2 * pw2 * k2
    phases = phases.reshape(n_win, bsz, kbd)
    kbd_pad = params["conv1_wbd"].shape[0]
    h2 = params["fc2_wp"].shape[1]
    row_bytes = 2 * (n_win * kbd_pad * 2) + 2 * (h2 * 4)
    resident = sum(int(v.size) * v.dtype.itemsize for name, v in params.items()
                   if not name.startswith("conv0"))
    mb_pad, tile_mb = _choose_tile_m(bsz, row_bytes, resident)
    phases = jnp.pad(phases, ((0, 0), (0, mb_pad - bsz), (0, kbd_pad - kbd)))
    out = conv_fc_fused_call(phases, params, tile_m=tile_mb)
    return out[:bsz, :shapes[2]]


if __name__ == "__main__":
    size = 16
    channels = [3, 4, 8]
    shapes = [32, 16, 10]
    kernel_size_conv, stride_size_conv = 5, 1
    kernel_size_pool, stride_size_pool = 2, 2
    batch = 2

    key = jax.random.PRNGKey(0)
    k_params, k_x = jax.random.split(key)
    params, flat_size = init_cnn_params(
        k_params, channels=channels, shapes=shapes, size=size,
        kernel_size_conv=kernel_size_conv, stride_size_conv=stride_size_conv,
        kernel_size_pool=kernel_size_pool, stride_size_pool=stride_size_pool)

    x = jax.random.normal(k_x, (batch, channels[0], size, size), jnp.float32)

    out = cnn_forward(
        params, x,
        channels=channels, shapes=shapes,
        kernel_size_conv=kernel_size_conv, stride_size_conv=stride_size_conv,
        kernel_size_pool=kernel_size_pool, stride_size_pool=stride_size_pool)
    out = jax.block_until_ready(out)
    assert out.shape == (batch, shapes[2]), out.shape
    assert bool(jnp.all(jnp.isfinite(out)))
    print("KERNEL_OK")
</pallas_src>

<mosaic_0001>
module attributes {stable_mosaic.version = 11 : i64} {
  func.func @_conv_relu_pool_kernel(%arg0: i32, %arg1: memref<4x176x80xbf16, #tpu.memory_space<vmem>>, %arg2: memref<80x128xbf16, #tpu.memory_space<vmem>>, %arg3: memref<1x128xf32, #tpu.memory_space<vmem>>, %arg4: memref<176x128xbf16, #tpu.memory_space<vmem>>) attributes {dimension_semantics = [#tpu.dimension_semantics<parallel>], iteration_bounds = array<i64: 1>, scalar_prefetch = 0 : i64, scratch_operands = 0 : i64, tpu.core_type = #tpu.core_type<tc>, window_params = [{transform_indices = @transform_0, window_bounds = array<i64: 4, 176, 80>}, {pipeline_mode = #tpu.pipeline_mode<synchronous>, transform_indices = @transform_1, window_bounds = array<i64: 80, 128>}, {pipeline_mode = #tpu.pipeline_mode<synchronous>, transform_indices = @transform_2, window_bounds = array<i64: 1, 128>}, {transform_indices = @transform_3, window_bounds = array<i64: 176, 128>}]} {
    %c0 = arith.constant 0 : index
    %c0_0 = arith.constant 0 : index
    %0 = vector.load %arg2[%c0, %c0_0] : memref<80x128xbf16, #tpu.memory_space<vmem>>, vector<80x128xbf16>
    %c0_1 = arith.constant 0 : index
    %c0_2 = arith.constant 0 : index
    %c0_3 = arith.constant 0 : index
    %1 = vector.load %arg1[%c0_1, %c0_2, %c0_3] : memref<4x176x80xbf16, #tpu.memory_space<vmem>>, vector<1x176x80xbf16>
    %2 = vector.shape_cast %1 : vector<1x176x80xbf16> to vector<176x80xbf16>
    %cst = arith.constant dense<0.000000e+00> : vector<176x128xf32>
    %3 = tpu.matmul %2, %0, %cst {dimension_numbers = #tpu.dot_dimension_numbers<[1], [0], [0], [1], [0, 0, 1, 1], [], []>} : vector<176x80xbf16>, vector<80x128xbf16>, vector<176x128xf32> -> vector<176x128xf32>
    %c1 = arith.constant 1 : index
    %c0_4 = arith.constant 0 : index
    %c0_5 = arith.constant 0 : index
    %4 = vector.load %arg1[%c1, %c0_4, %c0_5] : memref<4x176x80xbf16, #tpu.memory_space<vmem>>, vector<1x176x80xbf16>
    %5 = vector.shape_cast %4 : vector<1x176x80xbf16> to vector<176x80xbf16>
    %cst_6 = arith.constant dense<0.000000e+00> : vector<176x128xf32>
    %6 = tpu.matmul %5, %0, %cst_6 {dimension_numbers = #tpu.dot_dimension_numbers<[1], [0], [0], [1], [0, 0, 1, 1], [], []>} : vector<176x80xbf16>, vector<80x128xbf16>, vector<176x128xf32> -> vector<176x128xf32>
    %7 = arith.maximumf %3, %6 : vector<176x128xf32>
    %c2 = arith.constant 2 : index
    %c0_7 = arith.constant 0 : index
    %c0_8 = arith.constant 0 : index
    %8 = vector.load %arg1[%c2, %c0_7, %c0_8] : memref<4x176x80xbf16, #tpu.memory_space<vmem>>, vector<1x176x80xbf16>
    %9 = vector.shape_cast %8 : vector<1x176x80xbf16> to vector<176x80xbf16>
    %cst_9 = arith.constant dense<0.000000e+00> : vector<176x128xf32>
    %10 = tpu.matmul %9, %0, %cst_9 {dimension_numbers = #tpu.dot_dimension_numbers<[1], [0], [0], [1], [0, 0, 1, 1], [], []>} : vector<176x80xbf16>, vector<80x128xbf16>, vector<176x128xf32> -> vector<176x128xf32>
    %11 = arith.maximumf %7, %10 : vector<176x128xf32>
    %c3 = arith.constant 3 : index
    %c0_10 = arith.constant 0 : index
    %c0_11 = arith.constant 0 : index
    %12 = vector.load %arg1[%c3, %c0_10, %c0_11] : memref<4x176x80xbf16, #tpu.memory_space<vmem>>, vector<1x176x80xbf16>
    %13 = vector.shape_cast %12 : vector<1x176x80xbf16> to vector<176x80xbf16>
    %cst_12 = arith.constant dense<0.000000e+00> : vector<176x128xf32>
    %14 = tpu.matmul %13, %0, %cst_12 {dimension_numbers = #tpu.dot_dimension_numbers<[1], [0], [0], [1], [0, 0, 1, 1], [], []>} : vector<176x80xbf16>, vector<80x128xbf16>, vector<176x128xf32> -> vector<176x128xf32>
    %15 = arith.maximumf %11, %14 : vector<176x128xf32>
    %c0_13 = arith.constant 0 : index
    %c0_14 = arith.constant 0 : index
    %16 = vector.load %arg3[%c0_13, %c0_14] : memref<1x128xf32, #tpu.memory_space<vmem>>, vector<1x128xf32>
    %17 = vector.broadcast %16 : vector<1x128xf32> to vector<176x128xf32>
    %18 = arith.addf %15, %17 : vector<176x128xf32>
    %cst_15 = arith.constant 0.000000e+00 : f32
    %19 = vector.broadcast %cst_15 : f32 to vector<176x128xf32>
    %20 = arith.maximumf %18, %19 : vector<176x128xf32>
    %21 = arith.truncf %20 : vector<176x128xf32> to vector<176x128xbf16>
    %c0_16 = arith.constant 0 : index
    %c0_17 = arith.constant 0 : index
    %22 = vector.load %arg4[%c0_16, %c0_17] : memref<176x128xbf16, #tpu.memory_space<vmem>>, vector<176x128xbf16>
    tpu.vector_store %arg4[%c0_16, %c0_17], %21 {strides = array<i32>} : memref<176x128xbf16, #tpu.memory_space<vmem>>, vector<176x128xbf16>,
    return
  }
  func.func @transform_0(%arg0: i32) -> (i32, i32, i32) {
    %c0_i32 = arith.constant 0 : i32
    %c0_i32_0 = arith.constant 0 : i32
    %c0_i32_1 = arith.constant 0 : i32
    return %c0_i32, %arg0, %c0_i32_0 : i32, i32, i32
  }
  func.func @transform_1(%arg0: i32) -> (i32, i32) {
    %c0_i32 = arith.constant 0 : i32
    %c0_i32_0 = arith.constant 0 : i32
    %c0_i32_1 = arith.constant 0 : i32
    return %c0_i32, %c0_i32_0 : i32, i32
  }
  func.func @transform_2(%arg0: i32) -> (i32, i32) {
    %c0_i32 = arith.constant 0 : i32
    %c0_i32_0 = arith.constant 0 : i32
    %c0_i32_1 = arith.constant 0 : i32
    return %c0_i32, %c0_i32_0 : i32, i32
  }
  func.func @transform_3(%arg0: i32) -> (i32, i32) {
    %c0_i32 = arith.constant 0 : i32
    %c0_i32_0 = arith.constant 0 : i32
    return %arg0, %c0_i32 : i32, i32
  }
}

</mosaic_0001>

<llo_original>
// kernel: tpu_custom_call.1
$region0: #{tpu_custom_call.1}
  #allocation0 [shape = 'u32[]', space=smem, size = 0x4, offset = 0x4, fixed_abs, tag = 'smem constant byte address 0x4 - core index']
  #allocation1 [shape = 'u32[144,128]{1,0:T(1,128)}', space=vmem, size = 0x12000, scoped, tag = 'internal scratch']
  %s0 = inlined_call_operand.vmem [shape: bf16[4,176,80], index: 0, kind: input, shape index: {}]
  %s1 = inlined_call_operand.vmem [shape: bf16[80,128], index: 1, kind: input, shape index: {}]
  %s2 = inlined_call_operand.vmem [shape: f32[1,128], index: 2, kind: input, shape index: {}]
  %s3 = inlined_call_operand.hbm [shape: bf16[176,128], index: 3, kind: output, shape index: {}]
  %s4 = sld [smem:[#allocation0]]
  $region22: #{tpu_custom_call.1} parent=0
    _
  %s6 = ssub.s32 1, %s4
  %s7 = scalar_select 0, %s6, %s4
  $region1: #{tpu_custom_call.1} parent=0
    #allocation2 [shape = 'u8[45056]{0}', space=vmem, size = 0xb000, scoped, tag = 'output window, operand 0, single buffered']
    #allocation3 [shape = 's32[1]{0}', space=sflag, size = 0x4, scoped, tag = 'scoped memory for tpu_custom_call.1']
    %8 = vsyncpa [#allocation3], 0
    // Predicated region
    $region2: #{tpu_custom_call.1} parent=1 // pred_check
      _
    $region3: #{tpu_custom_call.1} parent=1 // pred_check_branch
      %10 = sbr.rel (0) target = $region5
    $region4: #{tpu_custom_call.1} parent=1 // pred_region
      _
    $region5: #{tpu_custom_call.1} parent=1 // pred_fallthru
      _
    // Predicated region
    $region6: #{tpu_custom_call.1} parent=1 // pred_check
      _
    $region7: #{tpu_custom_call.1} parent=1 // pred_check_branch
      %12 = sbr.rel (0) target = $region9
    $region8: #{tpu_custom_call.1} parent=1 // pred_region
      _
    $region9: #{tpu_custom_call.1} parent=1 // pred_fallthru
      _
    // Predicated region
    $region10: #{tpu_custom_call.1} parent=1 // pred_check
      _
    $region11: #{tpu_custom_call.1} parent=1 // pred_check_branch
      %14 = sbr.rel (0) target = $region13
    $region12: #{tpu_custom_call.1} parent=1 // pred_region
      _
    $region13: #{tpu_custom_call.1} parent=1 // pred_fallthru
      _
    %v16 = vld [vmem:[%s1] sm:$0xf]
    %v17 = vld [vmem:[%s1 + $0x4] sm:$0xf]
    %v18 = vld [vmem:[%s1 + $0x8] sm:$0xf]
    %v19 = vld [vmem:[%s1 + $0xc] sm:$0xf]
    %v20 = vld [vmem:[%s1 + $0x10] sm:$0xf]
    %v21 = vld [vmem:[%s1 + $0x14] sm:$0xf]
    %v22 = vld [vmem:[%s1 + $0x18] sm:$0xf]
    %v23 = vld [vmem:[%s1 + $0x1c] sm:$0xf]
    %v24 = vld [vmem:[%s1 + $0x20] sm:$0xf]
    %v25 = vld [vmem:[%s1 + $0x24] sm:$0xf]
    %v26 = vld [vmem:[%s0] sm:$0xf]
    %v27 = vld [vmem:[%s0 + $0x4] sm:$0xf]
    %v28 = vld [vmem:[%s0 + $0x8] sm:$0xf]
    %v29 = vld [vmem:[%s0 + $0xc] sm:$0xf]
    %v30 = vld [vmem:[%s0 + $0x10] sm:$0xf]
    %v31 = vld [vmem:[%s0 + $0x14] sm:$0xf]
    %v32 = vld [vmem:[%s0 + $0x18] sm:$0xf]
    %v33 = vld [vmem:[%s0 + $0x1c] sm:$0xf]
    %v34 = vld [vmem:[%s0 + $0x20] sm:$0xf]
    %v35 = vld [vmem:[%s0 + $0x24] sm:$0xf]
    %v36 = vld [vmem:[%s0 + $0x28] sm:$0xf]
    %v37 = vld [vmem:[%s0 + $0x2c] sm:$0xf]
    %v38 = vld [vmem:[%s0 + $0x30] sm:$0xf]
    %v39 = vld [vmem:[%s0 + $0x34] sm:$0xf]
    %v40 = vld [vmem:[%s0 + $0x38] sm:$0xf]
    %v41 = vld [vmem:[%s0 + $0x3c] sm:$0xf]
    %v42 = vld [vmem:[%s0 + $0x40] sm:$0xf]
    %v43 = vld [vmem:[%s0 + $0x44] sm:$0xf]
    %v44 = vld [vmem:[%s0 + $0x48] sm:$0xf]
    %v45 = vld [vmem:[%s0 + $0x4c] sm:$0xf]
    %v46 = vld [vmem:[%s0 + $0x50] sm:$0xf]
    %v47 = vld [vmem:[%s0 + $0x54] sm:$0xf]
    %v70 = vunpack.c.l.b16 %v26
    %v71 = vunpack.c.l.b16 %v27
    %v72 = vunpack.c.l.b16 %v28
    %v73 = vunpack.c.l.b16 %v29
    %v74 = vunpack.c.l.b16 %v30
    %v75 = vunpack.c.l.b16 %v31
    %v76 = vunpack.c.l.b16 %v32
    %v77 = vunpack.c.l.b16 %v33
    %v78 = vunpack.c.l.b16 %v34
    %v79 = vunpack.c.l.b16 %v35
    %v80 = vunpack.c.l.b16 %v36
    %v81 = vunpack.c.l.b16 %v37
    %v82 = vunpack.c.l.b16 %v38
    %v83 = vunpack.c.l.b16 %v39
    %v84 = vunpack.c.l.b16 %v40
    %v85 = vunpack.c.l.b16 %v41
    %v86 = vunpack.c.l.b16 %v42
    %v87 = vunpack.c.l.b16 %v43
    %v88 = vunpack.c.l.b16 %v44
    %v89 = vunpack.c.l.b16 %v45
    %v90 = vunpack.c.l.b16 %v46
    %v91 = vunpack.c.l.b16 %v47
    %v92 = vpack.c.b16 %v71, %v70
    %v93 = vpack.c.b16 %v73, %v72
    %v94 = vpack.c.b16 %v75, %v74
    %v95 = vpack.c.b16 %v77, %v76
    %v96 = vpack.c.b16 %v79, %v78
    %v97 = vpack.c.b16 %v81, %v80
    %v98 = vpack.c.b16 %v83, %v82
    %v99 = vpack.c.b16 %v85, %v84
    %v100 = vpack.c.b16 %v87, %v86
    %v101 = vpack.c.b16 %v89, %v88
    %v102 = vpack.c.b16 %v91, %v90
    %v113 = vunpack.c.l.b16 %v16
    %v114 = vunpack.c.l.b16 %v17
    %v115 = vunpack.c.l.b16 %v18
    %v116 = vunpack.c.l.b16 %v19
    %v117 = vunpack.c.l.b16 %v20
    %v118 = vunpack.c.l.b16 %v21
    %v119 = vunpack.c.l.b16 %v22
    %v120 = vunpack.c.l.b16 %v23
    %v121 = vunpack.c.l.b16 %v24
    %v122 = vunpack.c.l.b16 %v25
    %v123 = vpack.c.b16 %v114, %v113
    %v124 = vpack.c.b16 %v116, %v115
    %v125 = vpack.c.b16 %v118, %v117
    %v126 = vpack.c.b16 %v120, %v119
    %v127 = vpack.c.b16 %v122, %v121
    %vm133 = vcmask 654336
    %v135 = vsel %vm133, %v92, 0
    %v138 = vsel %vm133, %v93, 0
    %v141 = vsel %vm133, %v94, 0
    %v144 = vsel %vm133, %v95, 0
    %v147 = vsel %vm133, %v96, 0
    %v150 = vsel %vm133, %v97, 0
    %v153 = vsel %vm133, %v98, 0
    %v156 = vsel %vm133, %v99, 0
    %v159 = vsel %vm133, %v100, 0
    %v162 = vsel %vm133, %v101, 0
    %v165 = vsel %vm133, %v102, 0
    %167 = vmatprep.subr.bf16.mxu0 0
    %168 = vmatpush1.bf16.msra.mxu0 %v123
    %169 = vmatprep.subr.bf16.mxu0 0
    %170 = vmatpush1.bf16.msra.mxu0 %v124
    %171 = vmatprep.subr.bf16.mxu0 0
    %172 = vmatpush1.bf16.msra.mxu0 %v125
    %173 = vmatprep.subr.bf16.mxu0 0
    %174 = vmatpush1.bf16.msra.mxu0 %v126
    %175 = vmatprep.subr.bf16.mxu0 0
    %176 = vmatpush1.bf16.msra.mxu0 %v127
    %177 = vmatprep.subr.bf16.mxu0 0
    %178 = vmatpush1.bf16.msra.mxu0 0
    %179 = vmatprep.subr.bf16.mxu0 0
    %180 = vmatpush1.bf16.msra.mxu0 0
    %181 = vmatprep.subr.bf16.mxu0 0
    %182 = vmatpush1.bf16.msra.mxu0 0
    %183 = vmatprep.subr.bf16.mxu0 0
    %184 = vmatpush1.bf16.msra.mxu0 0
    %185 = vmatprep.subr.bf16.mxu0 0
    %186 = vmatpush1.bf16.msra.mxu0 0
    %187 = vmatprep.subr.bf16.mxu0 0
    %188 = vmatpush1.bf16.msra.mxu0 0
    %189 = vmatprep.subr.bf16.mxu0 0
    %190 = vmatpush1.bf16.msra.mxu0 0
    %191 = vmatprep.subr.bf16.mxu0 0
    %192 = vmatpush1.bf16.msra.mxu0 0
    %193 = vmatprep.subr.bf16.mxu0 0
    %194 = vmatpush1.bf16.msra.mxu0 0
    %195 = vmatprep.subr.bf16.mxu0 0
    %196 = vmatpush1.bf16.msra.mxu0 0
    %197 = vmatprep.subr.bf16.mxu0 0
    %198 = vmatpush1.bf16.msra.mxu0 0
    %199 = vmatprep.mubr.bf16.mxu0 0
    %200 = vmatmul.mubr.bf16.gmra.mrb[0].mxu0 %v135
    %v201 = vpop.f32.mrb[0].mxu0
    %v202 = vadd.f32 0.0, %v201
    %v203 = vpop.f32.mrb[0].mxu0
    %v204 = vpop.f32.mrb[0].mxu0
    %v205 = vadd.f32 0.0, %v204
    %v206 = vpop.f32.mrb[0].mxu0
    %207 = vmatprep.mubr.bf16.mxu0 0
    %208 = vmatmul.mubr.bf16.gmra.mrb[0].mxu0 %v138
    %v209 = vpop.f32.mrb[0].mxu0
    %v210 = vadd.f32 0.0, %v209
    %v211 = vpop.f32.mrb[0].mxu0
    %v212 = vpop.f32.mrb[0].mxu0
    %v213 = vadd.f32 0.0, %v212
    %v214 = vpop.f32.mrb[0].mxu0
    %215 = vmatprep.mubr.bf16.mxu0 0
    %216 = vmatmul.mubr.bf16.gmra.mrb[0].mxu0 %v141
    %v217 = vpop.f32.mrb[0].mxu0
    %v218 = vadd.f32 0.0, %v217
    %v219 = vpop.f32.mrb[0].mxu0
    %v220 = vpop.f32.mrb[0].mxu0
    %v221 = vadd.f32 0.0, %v220
    %v222 = vpop.f32.mrb[0].mxu0
    %223 = vmatprep.mubr.bf16.mxu0 0
    %224 = vmatmul.mubr.bf16.gmra.mrb[0].mxu0 %v144
    %v225 = vpop.f32.mrb[0].mxu0
    %v226 = vadd.f32 0.0, %v225
    %v227 = vpop.f32.mrb[0].mxu0
    %v228 = vpop.f32.mrb[0].mxu0
    %v229 = vadd.f32 0.0, %v228
    %v230 = vpop.f32.mrb[0].mxu0
    %231 = vmatprep.mubr.bf16.mxu0 0
    %232 = vmatmul.mubr.bf16.gmra.mrb[0].mxu0 %v147
    %v233 = vpop.f32.mrb[0].mxu0
    %v234 = vadd.f32 0.0, %v233
    %v235 = vpop.f32.mrb[0].mxu0
    %v236 = vpop.f32.mrb[0].mxu0
    %v237 = vadd.f32 0.0, %v236
    %v238 = vpop.f32.mrb[0].mxu0
    %239 = vmatprep.mubr.bf16.mxu0 0
    %240 = vmatmul.mubr.bf16.gmra.mrb[0].mxu0 %v150
    %v241 = vpop.f32.mrb[0].mxu0
    %v242 = vadd.f32 0.0, %v241
    %v243 = vpop.f32.mrb[0].mxu0
    %v244 = vpop.f32.mrb[0].mxu0
    %v245 = vadd.f32 0.0, %v244
    %v246 = vpop.f32.mrb[0].mxu0
    %247 = vmatprep.mubr.bf16.mxu0 0
    %248 = vmatmul.mubr.bf16.gmra.mrb[0].mxu0 %v153
    %v249 = vpop.f32.mrb[0].mxu0
    %v250 = vadd.f32 0.0, %v249
    %v251 = vpop.f32.mrb[0].mxu0
    %v252 = vpop.f32.mrb[0].mxu0
    %v253 = vadd.f32 0.0, %v252
    %v254 = vpop.f32.mrb[0].mxu0
    %255 = vmatprep.mubr.bf16.mxu0 0
    %256 = vmatmul.mubr.bf16.gmra.mrb[0].mxu0 %v156
    %v257 = vpop.f32.mrb[0].mxu0
    %v258 = vadd.f32 0.0, %v257
    %v259 = vpop.f32.mrb[0].mxu0
    %v260 = vpop.f32.mrb[0].mxu0
    %v261 = vadd.f32 0.0, %v260
    %v262 = vpop.f32.mrb[0].mxu0
    %263 = vmatprep.mubr.bf16.mxu0 0
    %264 = vmatmul.mubr.bf16.gmra.mrb[0].mxu0 %v159
    %v265 = vpop.f32.mrb[0].mxu0
    %v266 = vadd.f32 0.0, %v265
    %v267 = vpop.f32.mrb[0].mxu0
    %v268 = vpop.f32.mrb[0].mxu0
    %v269 = vadd.f32 0.0, %v268
    %v270 = vpop.f32.mrb[0].mxu0
    %271 = vmatprep.mubr.bf16.mxu0 0
    %272 = vmatmul.mubr.bf16.gmra.mrb[0].mxu0 %v162
    %v273 = vpop.f32.mrb[0].mxu0
    %v274 = vadd.f32 0.0, %v273
    %v275 = vpop.f32.mrb[0].mxu0
    %v276 = vpop.f32.mrb[0].mxu0
    %v277 = vadd.f32 0.0, %v276
    %v278 = vpop.f32.mrb[0].mxu0
    %279 = vmatprep.mubr.bf16.mxu0 0
    %280 = vmatmul.mubr.bf16.gmra.mrb[0].mxu0 %v165
    %v281 = vpop.f32.mrb[0].mxu0
    %v282 = vadd.f32 0.0, %v281
    %v283 = vpop.f32.mrb[0].mxu0
    %v284 = vpop.f32.mrb[0].mxu0
    %v285 = vadd.f32 0.0, %v284
    %v286 = vpop.f32.mrb[0].mxu0
    %287 = vdwg.mxu0
    %s288 = scalar_lea.vmem %s0, 88
    %v289 = vld [vmem:[%s288] sm:$0xf]
    %v290 = vld [vmem:[%s288 + $0x4] sm:$0xf]
    %v291 = vld [vmem:[%s288 + $0x8] sm:$0xf]
    %v292 = vld [vmem:[%s288 + $0xc] sm:$0xf]
    %v293 = vld [vmem:[%s288 + $0x10] sm:$0xf]
    %v294 = vld [vmem:[%s288 + $0x14] sm:$0xf]
    %v295 = vld [vmem:[%s288 + $0x18] sm:$0xf]
    %v296 = vld [vmem:[%s288 + $0x1c] sm:$0xf]
    %v297 = vld [vmem:[%s288 + $0x20] sm:$0xf]
    %v298 = vld [vmem:[%s288 + $0x24] sm:$0xf]
    %v299 = vld [vmem:[%s288 + $0x28] sm:$0xf]
    %v300 = vld [vmem:[%s288 + $0x2c] sm:$0xf]
    %v301 = vld [vmem:[%s288 + $0x30] sm:$0xf]
    %v302 = vld [vmem:[%s288 + $0x34] sm:$0xf]
    %v303 = vld [vmem:[%s288 + $0x38] sm:$0xf]
    %v304 = vld [vmem:[%s288 + $0x3c] sm:$0xf]
    %v305 = vld [vmem:[%s288 + $0x40] sm:$0xf]
    %v306 = vld [vmem:[%s288 + $0x44] sm:$0xf]
    %v307 = vld [vmem:[%s288 + $0x48] sm:$0xf]
    %v308 = vld [vmem:[%s288 + $0x4c] sm:$0xf]
    %v309 = vld [vmem:[%s288 + $0x50] sm:$0xf]
    %v310 = vld [vmem:[%s288 + $0x54] sm:$0xf]
    %v333 = vunpack.c.l.b16 %v289
    %v334 = vunpack.c.l.b16 %v290
    %v335 = vunpack.c.l.b16 %v291
    %v336 = vunpack.c.l.b16 %v292
    %v337 = vunpack.c.l.b16 %v293
    %v338 = vunpack.c.l.b16 %v294
    %v339 = vunpack.c.l.b16 %v295
    %v340 = vunpack.c.l.b16 %v296
    %v341 = vunpack.c.l.b16 %v297
    %v342 = vunpack.c.l.b16 %v298
    %v343 = vunpack.c.l.b16 %v299
    %v344 = vunpack.c.l.b16 %v300
    %v345 = vunpack.c.l.b16 %v301
    %v346 = vunpack.c.l.b16 %v302
    %v347 = vunpack.c.l.b16 %v303
    %v348 = vunpack.c.l.b16 %v304
    %v349 = vunpack.c.l.b16 %v305
    %v350 = vunpack.c.l.b16 %v306
    %v351 = vunpack.c.l.b16 %v307
    %v352 = vunpack.c.l.b16 %v308
    %v353 = vunpack.c.l.b16 %v309
    %v354 = vunpack.c.l.b16 %v310
    %v355 = vpack.c.b16 %v334, %v333
    %v356 = vpack.c.b16 %v336, %v335
    %v357 = vpack.c.b16 %v338, %v337
    %v358 = vpack.c.b16 %v340, %v339
    %v359 = vpack.c.b16 %v342, %v341
    %v360 = vpack.c.b16 %v344, %v343
    %v361 = vpack.c.b16 %v346, %v345
    %v362 = vpack.c.b16 %v348, %v347
    %v363 = vpack.c.b16 %v350, %v349
    %v364 = vpack.c.b16 %v352, %v351
    %v365 = vpack.c.b16 %v354, %v353
    %v367 = vsel %vm133, %v355, 0
    %v370 = vsel %vm133, %v356, 0
    %v373 = vsel %vm133, %v357, 0
    %v376 = vsel %vm133, %v358, 0
    %v379 = vsel %vm133, %v359, 0
    %v382 = vsel %vm133, %v360, 0
    %v385 = vsel %vm133, %v361, 0
    %v388 = vsel %vm133, %v362, 0
    %v391 = vsel %vm133, %v363, 0
    %v394 = vsel %vm133, %v364, 0
    %v397 = vsel %vm133, %v365, 0
    %399 = vmatprep.subr.bf16.mxu0 0
    %400 = vmatpush1.bf16.msra.mxu0 %v123
    %401 = vmatprep.subr.bf16.mxu0 0
    %402 = vmatpush1.bf16.msra.mxu0 %v124
    %403 = vmatprep.subr.bf16.mxu0 0
    %404 = vmatpush1.bf16.msra.mxu0 %v125
    %405 = vmatprep.subr.bf16.mxu0 0
    %406 = vmatpush1.bf16.msra.mxu0 %v126
    %407 = vmatprep.subr.bf16.mxu0 0
    %408 = vmatpush1.bf16.msra.mxu0 %v127
    %409 = vmatprep.subr.bf16.mxu0 0
    %410 = vmatpush1.bf16.msra.mxu0 0
    %411 = vmatprep.subr.bf16.mxu0 0
    %412 = vmatpush1.bf16.msra.mxu0 0
    %413 = vmatprep.subr.bf16.mxu0 0
    %414 = vmatpush1.bf16.msra.mxu0 0
    %415 = vmatprep.subr.bf16.mxu0 0
    %416 = vmatpush1.bf16.msra.mxu0 0
    %417 = vmatprep.subr.bf16.mxu0 0
    %418 = vmatpush1.bf16.msra.mxu0 0
    %419 = vmatprep.subr.bf16.mxu0 0
    %420 = vmatpush1.bf16.msra.mxu0 0
    %421 = vmatprep.subr.bf16.mxu0 0
    %422 = vmatpush1.bf16.msra.mxu0 0
    %423 = vmatprep.subr.bf16.mxu0 0
    %424 = vmatpush1.bf16.msra.mxu0 0
    %425 = vmatprep.subr.bf16.mxu0 0
    %426 = vmatpush1.bf16.msra.mxu0 0
    %427 = vmatprep.subr.bf16.mxu0 0
    %428 = vmatpush1.bf16.msra.mxu0 0
    %429 = vmatprep.subr.bf16.mxu0 0
    %430 = vmatpush1.bf16.msra.mxu0 0
    %431 = vmatprep.mubr.bf16.mxu0 0
    %432 = vmatmul.mubr.bf16.gmra.mrb[0].mxu0 %v367
    %v433 = vpop.f32.mrb[0].mxu0
    %v434 = vadd.f32 0.0, %v433
    %v435 = vpop.f32.mrb[0].mxu0
    %v436 = vpop.f32.mrb[0].mxu0
    %v437 = vadd.f32 0.0, %v436
    %v438 = vpop.f32.mrb[0].mxu0
    %439 = vmatprep.mubr.bf16.mxu0 0
    %440 = vmatmul.mubr.bf16.gmra.mrb[0].mxu0 %v370
    %v441 = vpop.f32.mrb[0].mxu0
    %v442 = vadd.f32 0.0, %v441
    %v443 = vpop.f32.mrb[0].mxu0
    %v444 = vpop.f32.mrb[0].mxu0
    %v445 = vadd.f32 0.0, %v444
    %v446 = vpop.f32.mrb[0].mxu0
    %447 = vmatprep.mubr.bf16.mxu0 0
    %448 = vmatmul.mubr.bf16.gmra.mrb[0].mxu0 %v373
    %v449 = vpop.f32.mrb[0].mxu0
    %v450 = vadd.f32 0.0, %v449
    %v451 = vpop.f32.mrb[0].mxu0
    %v452 = vpop.f32.mrb[0].mxu0
    %v453 = vadd.f32 0.0, %v452
    %v454 = vpop.f32.mrb[0].mxu0
    %455 = vmatprep.mubr.bf16.mxu0 0
    %456 = vmatmul.mubr.bf16.gmra.mrb[0].mxu0 %v376
    %v457 = vpop.f32.mrb[0].mxu0
    %v458 = vadd.f32 0.0, %v457
    %v459 = vpop.f32.mrb[0].mxu0
    %v460 = vpop.f32.mrb[0].mxu0
    %v461 = vadd.f32 0.0, %v460
    %v462 = vpop.f32.mrb[0].mxu0
    %463 = vmatprep.mubr.bf16.mxu0 0
    %464 = vmatmul.mubr.bf16.gmra.mrb[0].mxu0 %v379
    %v465 = vpop.f32.mrb[0].mxu0
    %v466 = vadd.f32 0.0, %v465
    %v467 = vpop.f32.mrb[0].mxu0
    %v468 = vpop.f32.mrb[0].mxu0
    %v469 = vadd.f32 0.0, %v468
    %v470 = vpop.f32.mrb[0].mxu0
    %471 = vmatprep.mubr.bf16.mxu0 0
    %472 = vmatmul.mubr.bf16.gmra.mrb[0].mxu0 %v382
    %v473 = vpop.f32.mrb[0].mxu0
    %v474 = vadd.f32 0.0, %v473
    %v475 = vpop.f32.mrb[0].mxu0
    %v476 = vpop.f32.mrb[0].mxu0
    %v477 = vadd.f32 0.0, %v476
    %v478 = vpop.f32.mrb[0].mxu0
    %479 = vmatprep.mubr.bf16.mxu0 0
    %480 = vmatmul.mubr.bf16.gmra.mrb[0].mxu0 %v385
    %v481 = vpop.f32.mrb[0].mxu0
    %v482 = vadd.f32 0.0, %v481
    %v483 = vpop.f32.mrb[0].mxu0
    %v484 = vpop.f32.mrb[0].mxu0
    %v485 = vadd.f32 0.0, %v484
    %v486 = vpop.f32.mrb[0].mxu0
    %487 = vmatprep.mubr.bf16.mxu0 0
    %488 = vmatmul.mubr.bf16.gmra.mrb[0].mxu0 %v388
    %v489 = vpop.f32.mrb[0].mxu0
    %v490 = vadd.f32 0.0, %v489
    %v491 = vpop.f32.mrb[0].mxu0
    %v492 = vpop.f32.mrb[0].mxu0
    %v493 = vadd.f32 0.0, %v492
    %v494 = vpop.f32.mrb[0].mxu0
    %495 = vmatprep.mubr.bf16.mxu0 0
    %496 = vmatmul.mubr.bf16.gmra.mrb[0].mxu0 %v391
    %v497 = vpop.f32.mrb[0].mxu0
    %v498 = vadd.f32 0.0, %v497
    %v499 = vpop.f32.mrb[0].mxu0
    %v500 = vpop.f32.mrb[0].mxu0
    %v501 = vadd.f32 0.0, %v500
    %v502 = vpop.f32.mrb[0].mxu0
    %503 = vmatprep.mubr.bf16.mxu0 0
    %504 = vmatmul.mubr.bf16.gmra.mrb[0].mxu0 %v394
    %v505 = vpop.f32.mrb[0].mxu0
    %v506 = vadd.f32 0.0, %v505
    %v507 = vpop.f32.mrb[0].mxu0
    %v508 = vpop.f32.mrb[0].mxu0
    %v509 = vadd.f32 0.0, %v508
    %v510 = vpop.f32.mrb[0].mxu0
    %511 = vmatprep.mubr.bf16.mxu0 0
    %512 = vmatmul.mubr.bf16.gmra.mrb[0].mxu0 %v397
    %v513 = vpop.f32.mrb[0].mxu0
    %v514 = vadd.f32 0.0, %v513
    %v515 = vpop.f32.mrb[0].mxu0
    %v516 = vpop.f32.mrb[0].mxu0
    %v517 = vadd.f32 0.0, %v516
    %v518 = vpop.f32.mrb[0].mxu0
    %519 = vdwg.mxu0
    %v520 = vmax.f32 %v202, %v434
    %v521 = vmax.f32 %v205, %v437
    %v522 = vmax.f32 %v210, %v442
    %v523 = vmax.f32 %v213, %v445
    %v524 = vmax.f32 %v218, %v450
    %v525 = vmax.f32 %v221, %v453
    %v526 = vmax.f32 %v226, %v458
    %v527 = vmax.f32 %v229, %v461
    %v528 = vmax.f32 %v234, %v466
    %v529 = vmax.f32 %v237, %v469
    %v530 = vmax.f32 %v242, %v474
    %v531 = vmax.f32 %v245, %v477
    %v532 = vmax.f32 %v250, %v482
    %v533 = vmax.f32 %v253, %v485
    %v534 = vmax.f32 %v258, %v490
    %v535 = vmax.f32 %v261, %v493
    %v536 = vmax.f32 %v266, %v498
    %v537 = vmax.f32 %v269, %v501
    %v538 = vmax.f32 %v274, %v506
    %v539 = vmax.f32 %v277, %v509
    %v540 = vmax.f32 %v282, %v514
    %v541 = vmax.f32 %v285, %v517
    %s542 = scalar_lea.vmem %s0, 176
    %v543 = vld [vmem:[%s542] sm:$0xf]
    %v544 = vld [vmem:[%s542 + $0x4] sm:$0xf]
    %v545 = vld [vmem:[%s542 + $0x8] sm:$0xf]
    %v546 = vld [vmem:[%s542 + $0xc] sm:$0xf]
    %v547 = vld [vmem:[%s542 + $0x10] sm:$0xf]
    %v548 = vld [vmem:[%s542 + $0x14] sm:$0xf]
    %v549 = vld [vmem:[%s542 + $0x18] sm:$0xf]
    %v550 = vld [vmem:[%s542 + $0x1c] sm:$0xf]
    %v551 = vld [vmem:[%s542 + $0x20] sm:$0xf]
    %v552 = vld [vmem:[%s542 + $0x24] sm:$0xf]
    %v553 = vld [vmem:[%s542 + $0x28] sm:$0xf]
    %v554 = vld [vmem:[%s542 + $0x2c] sm:$0xf]
    %v555 = vld [vmem:[%s542 + $0x30] sm:$0xf]
    %v556 = vld [vmem:[%s542 + $0x34] sm:$0xf]
    %v557 = vld [vmem:[%s542 + $0x38] sm:$0xf]
    %v558 = vld [vmem:[%s542 + $0x3c] sm:$0xf]
    %v559 = vld [vmem:[%s542 + $0x40] sm:$0xf]
    %v560 = vld [vmem:[%s542 + $0x44] sm:$0xf]
    %v561 = vld [vmem:[%s542 + $0x48] sm:$0xf]
    %v562 = vld [vmem:[%s542 + $0x4c] sm:$0xf]
    %v563 = vld [vmem:[%s542 + $0x50] sm:$0xf]
    %v564 = vld [vmem:[%s542 + $0x54] sm:$0xf]
    %v587 = vunpack.c.l.b16 %v543
    %v588 = vunpack.c.l.b16 %v544
    %v589 = vunpack.c.l.b16 %v545
    %v590 = vunpack.c.l.b16 %v546
    %v591 = vunpack.c.l.b16 %v547
    %v592 = vunpack.c.l.b16 %v548
    %v593 = vunpack.c.l.b16 %v549
    %v594 = vunpack.c.l.b16 %v550
    %v595 = vunpack.c.l.b16 %v551
    %v596 = vunpack.c.l.b16 %v552
    %v597 = vunpack.c.l.b16 %v553
    %v598 = vunpack.c.l.b16 %v554
    %v599 = vunpack.c.l.b16 %v555
    %v600 = vunpack.c.l.b16 %v556
    %v601 = vunpack.c.l.b16 %v557
    %v602 = vunpack.c.l.b16 %v558
    %v603 = vunpack.c.l.b16 %v559
    %v604 = vunpack.c.l.b16 %v560
    %v605 = vunpack.c.l.b16 %v561
    %v606 = vunpack.c.l.b16 %v562
    %v607 = vunpack.c.l.b16 %v563
    %v608 = vunpack.c.l.b16 %v564
    %v609 = vpack.c.b16 %v588, %v587
    %v610 = vpack.c.b16 %v590, %v589
    %v611 = vpack.c.b16 %v592, %v591
    %v612 = vpack.c.b16 %v594, %v593
    %v613 = vpack.c.b16 %v596, %v595
    %v614 = vpack.c.b16 %v598, %v597
    %v615 = vpack.c.b16 %v600, %v599
    %v616 = vpack.c.b16 %v602, %v601
    %v617 = vpack.c.b16 %v604, %v603
    %v618 = vpack.c.b16 %v606, %v605
    %v619 = vpack.c.b16 %v608, %v607
    %v621 = vsel %vm133, %v609, 0
    %v624 = vsel %vm133, %v610, 0
    %v627 = vsel %vm133, %v611, 0
    %v630 = vsel %vm133, %v612, 0
    %v633 = vsel %vm133, %v613, 0
    %v636 = vsel %vm133, %v614, 0
    %v639 = vsel %vm133, %v615, 0
    %v642 = vsel %vm133, %v616, 0
    %v645 = vsel %vm133, %v617, 0
    %v648 = vsel %vm133, %v618, 0
    %v651 = vsel %vm133, %v619, 0
    %653 = vmatprep.subr.bf16.mxu0 0
    %654 = vmatpush1.bf16.msra.mxu0 %v123
    %655 = vmatprep.subr.bf16.mxu0 0
    %656 = vmatpush1.bf16.msra.mxu0 %v124
    %657 = vmatprep.subr.bf16.mxu0 0
    %658 = vmatpush1.bf16.msra.mxu0 %v125
    %659 = vmatprep.subr.bf16.mxu0 0
    %660 = vmatpush1.bf16.msra.mxu0 %v126
    %661 = vmatprep.subr.bf16.mxu0 0
    %662 = vmatpush1.bf16.msra.mxu0 %v127
    %663 = vmatprep.subr.bf16.mxu0 0
    %664 = vmatpush1.bf16.msra.mxu0 0
    %665 = vmatprep.subr.bf16.mxu0 0
    %666 = vmatpush1.bf16.msra.mxu0 0
    %667 = vmatprep.subr.bf16.mxu0 0
    %668 = vmatpush1.bf16.msra.mxu0 0
    %669 = vmatprep.subr.bf16.mxu0 0
    %670 = vmatpush1.bf16.msra.mxu0 0
    %671 = vmatprep.subr.bf16.mxu0 0
    %672 = vmatpush1.bf16.msra.mxu0 0
    %673 = vmatprep.subr.bf16.mxu0 0
    %674 = vmatpush1.bf16.msra.mxu0 0
    %675 = vmatprep.subr.bf16.mxu0 0
    %676 = vmatpush1.bf16.msra.mxu0 0
    %677 = vmatprep.subr.bf16.mxu0 0
    %678 = vmatpush1.bf16.msra.mxu0 0
    %679 = vmatprep.subr.bf16.mxu0 0
    %680 = vmatpush1.bf16.msra.mxu0 0
    %681 = vmatprep.subr.bf16.mxu0 0
    %682 = vmatpush1.bf16.msra.mxu0 0
    %683 = vmatprep.subr.bf16.mxu0 0
    %684 = vmatpush1.bf16.msra.mxu0 0
    %685 = vmatprep.mubr.bf16.mxu0 0
    %686 = vmatmul.mubr.bf16.gmra.mrb[0].mxu0 %v621
    %v687 = vpop.f32.mrb[0].mxu0
    %v688 = vadd.f32 0.0, %v687
    %v689 = vpop.f32.mrb[0].mxu0
    %v690 = vpop.f32.mrb[0].mxu0
    %v691 = vadd.f32 0.0, %v690
    %v692 = vpop.f32.mrb[0].mxu0
    %693 = vmatprep.mubr.bf16.mxu0 0
    %694 = vmatmul.mubr.bf16.gmra.mrb[0].mxu0 %v624
    %v695 = vpop.f32.mrb[0].mxu0
    %v696 = vadd.f32 0.0, %v695
    %v697 = vpop.f32.mrb[0].mxu0
    %v698 = vpop.f32.mrb[0].mxu0
    %v699 = vadd.f32 0.0, %v698
    %v700 = vpop.f32.mrb[0].mxu0
    %701 = vmatprep.mubr.bf16.mxu0 0
    %702 = vmatmul.mubr.bf16.gmra.mrb[0].mxu0 %v627
    %v703 = vpop.f32.mrb[0].mxu0
    %v704 = vadd.f32 0.0, %v703
    %v705 = vpop.f32.mrb[0].mxu0
    %v706 = vpop.f32.mrb[0].mxu0
    %v707 = vadd.f32 0.0, %v706
    %v708 = vpop.f32.mrb[0].mxu0
    %709 = vmatprep.mubr.bf16.mxu0 0
    %710 = vmatmul.mubr.bf16.gmra.mrb[0].mxu0 %v630
    %v711 = vpop.f32.mrb[0].mxu0
    %v712 = vadd.f32 0.0, %v711
    %v713 = vpop.f32.mrb[0].mxu0
    %v714 = vpop.f32.mrb[0].mxu0
    %v715 = vadd.f32 0.0, %v714
    %v716 = vpop.f32.mrb[0].mxu0
    %717 = vmatprep.mubr.bf16.mxu0 0
    %718 = vmatmul.mubr.bf16.gmra.mrb[0].mxu0 %v633
    %v719 = vpop.f32.mrb[0].mxu0
    %v720 = vadd.f32 0.0, %v719
    %v721 = vpop.f32.mrb[0].mxu0
    %v722 = vpop.f32.mrb[0].mxu0
    %v723 = vadd.f32 0.0, %v722
    %v724 = vpop.f32.mrb[0].mxu0
    %725 = vmatprep.mubr.bf16.mxu0 0
    %726 = vmatmul.mubr.bf16.gmra.mrb[0].mxu0 %v636
    %v727 = vpop.f32.mrb[0].mxu0
    %v728 = vadd.f32 0.0, %v727
    %v729 = vpop.f32.mrb[0].mxu0
    %v730 = vpop.f32.mrb[0].mxu0
    %v731 = vadd.f32 0.0, %v730
    %v732 = vpop.f32.mrb[0].mxu0
    %733 = vmatprep.mubr.bf16.mxu0 0
    %734 = vmatmul.mubr.bf16.gmra.mrb[0].mxu0 %v639
    %v735 = vpop.f32.mrb[0].mxu0
    %v736 = vadd.f32 0.0, %v735
    %v737 = vpop.f32.mrb[0].mxu0
    %v738 = vpop.f32.mrb[0].mxu0
    %v739 = vadd.f32 0.0, %v738
    %v740 = vpop.f32.mrb[0].mxu0
    %741 = vmatprep.mubr.bf16.mxu0 0
    %742 = vmatmul.mubr.bf16.gmra.mrb[0].mxu0 %v642
    %v743 = vpop.f32.mrb[0].mxu0
    %v744 = vadd.f32 0.0, %v743
    %v745 = vpop.f32.mrb[0].mxu0
    %v746 = vpop.f32.mrb[0].mxu0
    %v747 = vadd.f32 0.0, %v746
    %v748 = vpop.f32.mrb[0].mxu0
    %749 = vmatprep.mubr.bf16.mxu0 0
    %750 = vmatmul.mubr.bf16.gmra.mrb[0].mxu0 %v645
    %v751 = vpop.f32.mrb[0].mxu0
    %v752 = vadd.f32 0.0, %v751
    %v753 = vpop.f32.mrb[0].mxu0
    %v754 = vpop.f32.mrb[0].mxu0
    %v755 = vadd.f32 0.0, %v754
    %v756 = vpop.f32.mrb[0].mxu0
    %757 = vmatprep.mubr.bf16.mxu0 0
    %758 = vmatmul.mubr.bf16.gmra.mrb[0].mxu0 %v648
    %v759 = vpop.f32.mrb[0].mxu0
    %v760 = vadd.f32 0.0, %v759
    %v761 = vpop.f32.mrb[0].mxu0
    %v762 = vpop.f32.mrb[0].mxu0
    %v763 = vadd.f32 0.0, %v762
    %v764 = vpop.f32.mrb[0].mxu0
    %765 = vmatprep.mubr.bf16.mxu0 0
    %766 = vmatmul.mubr.bf16.gmra.mrb[0].mxu0 %v651
    %v767 = vpop.f32.mrb[0].mxu0
    %v768 = vadd.f32 0.0, %v767
    %v769 = vpop.f32.mrb[0].mxu0
    %v770 = vpop.f32.mrb[0].mxu0
    %v771 = vadd.f32 0.0, %v770
    %v772 = vpop.f32.mrb[0].mxu0
    %773 = vdwg.mxu0
    %v774 = vmax.f32 %v520, %v688
    %v775 = vmax.f32 %v521, %v691
    %v776 = vmax.f32 %v522, %v696
    %v777 = vmax.f32 %v523, %v699
    %v778 = vmax.f32 %v524, %v704
    %v779 = vmax.f32 %v525, %v707
    %v780 = vmax.f32 %v526, %v712
    %v781 = vmax.f32 %v527, %v715
    %v782 = vmax.f32 %v528, %v720
    %v783 = vmax.f32 %v529, %v723
    %v784 = vmax.f32 %v530, %v728
    %v785 = vmax.f32 %v531, %v731
    %v786 = vmax.f32 %v532, %v736
    %v787 = vmax.f32 %v533, %v739
    %v788 = vmax.f32 %v534, %v744
    %v789 = vmax.f32 %v535, %v747
    %v790 = vmax.f32 %v536, %v752
    %v791 = vmax.f32 %v537, %v755
    %v792 = vmax.f32 %v538, %v760
    %v793 = vmax.f32 %v539, %v763
    %v794 = vmax.f32 %v540, %v768
    %v795 = vmax.f32 %v541, %v771
    %s796 = scalar_lea.vmem %s0, 264
    %v797 = vld [vmem:[%s796] sm:$0xf]
    %v798 = vld [vmem:[%s796 + $0x4] sm:$0xf]
    %v799 = vld [vmem:[%s796 + $0x8] sm:$0xf]
    %v800 = vld [vmem:[%s796 + $0xc] sm:$0xf]
    %v801 = vld [vmem:[%s796 + $0x10] sm:$0xf]
    %v802 = vld [vmem:[%s796 + $0x14] sm:$0xf]
    %v803 = vld [vmem:[%s796 + $0x18] sm:$0xf]
    %v804 = vld [vmem:[%s796 + $0x1c] sm:$0xf]
    %v805 = vld [vmem:[%s796 + $0x20] sm:$0xf]
    %v806 = vld [vmem:[%s796 + $0x24] sm:$0xf]
    %v807 = vld [vmem:[%s796 + $0x28] sm:$0xf]
    %v808 = vld [vmem:[%s796 + $0x2c] sm:$0xf]
    %v809 = vld [vmem:[%s796 + $0x30] sm:$0xf]
    %v810 = vld [vmem:[%s796 + $0x34] sm:$0xf]
    %v811 = vld [vmem:[%s796 + $0x38] sm:$0xf]
    %v812 = vld [vmem:[%s796 + $0x3c] sm:$0xf]
    %v813 = vld [vmem:[%s796 + $0x40] sm:$0xf]
    %v814 = vld [vmem:[%s796 + $0x44] sm:$0xf]
    %v815 = vld [vmem:[%s796 + $0x48] sm:$0xf]
    %v816 = vld [vmem:[%s796 + $0x4c] sm:$0xf]
    %v817 = vld [vmem:[%s796 + $0x50] sm:$0xf]
    %v818 = vld [vmem:[%s796 + $0x54] sm:$0xf]
    %v841 = vunpack.c.l.b16 %v797
    %v842 = vunpack.c.l.b16 %v798
    %v843 = vunpack.c.l.b16 %v799
    %v844 = vunpack.c.l.b16 %v800
    %v845 = vunpack.c.l.b16 %v801
    %v846 = vunpack.c.l.b16 %v802
    %v847 = vunpack.c.l.b16 %v803
    %v848 = vunpack.c.l.b16 %v804
    %v849 = vunpack.c.l.b16 %v805
    %v850 = vunpack.c.l.b16 %v806
    %v851 = vunpack.c.l.b16 %v807
    %v852 = vunpack.c.l.b16 %v808
    %v853 = vunpack.c.l.b16 %v809
    %v854 = vunpack.c.l.b16 %v810
    %v855 = vunpack.c.l.b16 %v811
    %v856 = vunpack.c.l.b16 %v812
    %v857 = vunpack.c.l.b16 %v813
    %v858 = vunpack.c.l.b16 %v814
    %v859 = vunpack.c.l.b16 %v815
    %v860 = vunpack.c.l.b16 %v816
    %v861 = vunpack.c.l.b16 %v817
    %v862 = vunpack.c.l.b16 %v818
    %v863 = vpack.c.b16 %v842, %v841
    %v864 = vpack.c.b16 %v844, %v843
    %v865 = vpack.c.b16 %v846, %v845
    %v866 = vpack.c.b16 %v848, %v847
    %v867 = vpack.c.b16 %v850, %v849
    %v868 = vpack.c.b16 %v852, %v851
    %v869 = vpack.c.b16 %v854, %v853
    %v870 = vpack.c.b16 %v856, %v855
    %v871 = vpack.c.b16 %v858, %v857
    %v872 = vpack.c.b16 %v860, %v859
    %v873 = vpack.c.b16 %v862, %v861
    %v875 = vsel %vm133, %v863, 0
    %v878 = vsel %vm133, %v864, 0
    %v881 = vsel %vm133, %v865, 0
    %v884 = vsel %vm133, %v866, 0
    %v887 = vsel %vm133, %v867, 0
    %v890 = vsel %vm133, %v868, 0
    %v893 = vsel %vm133, %v869, 0
    %v896 = vsel %vm133, %v870, 0
    %v899 = vsel %vm133, %v871, 0
    %v902 = vsel %vm133, %v872, 0
    %v905 = vsel %vm133, %v873, 0
    %907 = vmatprep.subr.bf16.mxu0 0
    %908 = vmatpush1.bf16.msra.mxu0 %v123
    %909 = vmatprep.subr.bf16.mxu0 0
    %910 = vmatpush1.bf16.msra.mxu0 %v124
    %911 = vmatprep.subr.bf16.mxu0 0
    %912 = vmatpush1.bf16.msra.mxu0 %v125
    %913 = vmatprep.subr.bf16.mxu0 0
    %914 = vmatpush1.bf16.msra.mxu0 %v126
    %915 = vmatprep.subr.bf16.mxu0 0
    %916 = vmatpush1.bf16.msra.mxu0 %v127
    %917 = vmatprep.subr.bf16.mxu0 0
    %918 = vmatpush1.bf16.msra.mxu0 0
    %919 = vmatprep.subr.bf16.mxu0 0
    %920 = vmatpush1.bf16.msra.mxu0 0
    %921 = vmatprep.subr.bf16.mxu0 0
    %922 = vmatpush1.bf16.msra.mxu0 0
    %923 = vmatprep.subr.bf16.mxu0 0
    %924 = vmatpush1.bf16.msra.mxu0 0
    %925 = vmatprep.subr.bf16.mxu0 0
    %926 = vmatpush1.bf16.msra.mxu0 0
    %927 = vmatprep.subr.bf16.mxu0 0
    %928 = vmatpush1.bf16.msra.mxu0 0
    %929 = vmatprep.subr.bf16.mxu0 0
    %930 = vmatpush1.bf16.msra.mxu0 0
    %931 = vmatprep.subr.bf16.mxu0 0
    %932 = vmatpush1.bf16.msra.mxu0 0
    %933 = vmatprep.subr.bf16.mxu0 0
    %934 = vmatpush1.bf16.msra.mxu0 0
    %935 = vmatprep.subr.bf16.mxu0 0
    %936 = vmatpush1.bf16.msra.mxu0 0
    %937 = vmatprep.subr.bf16.mxu0 0
    %938 = vmatpush1.bf16.msra.mxu0 0
    %939 = vmatprep.mubr.bf16.mxu0 0
    %940 = vmatmul.mubr.bf16.gmra.mrb[0].mxu0 %v875
    %v941 = vpop.f32.mrb[0].mxu0
    %v942 = vadd.f32 0.0, %v941
    %v943 = vpop.f32.mrb[0].mxu0
    %v944 = vpop.f32.mrb[0].mxu0
    %v945 = vadd.f32 0.0, %v944
    %v946 = vpop.f32.mrb[0].mxu0
    %947 = vmatprep.mubr.bf16.mxu0 0
    %948 = vmatmul.mubr.bf16.gmra.mrb[0].mxu0 %v878
    %v949 = vpop.f32.mrb[0].mxu0
    %v950 = vadd.f32 0.0, %v949
    %v951 = vpop.f32.mrb[0].mxu0
    %v952 = vpop.f32.mrb[0].mxu0
    %v953 = vadd.f32 0.0, %v952
    %v954 = vpop.f32.mrb[0].mxu0
    %955 = vmatprep.mubr.bf16.mxu0 0
    %956 = vmatmul.mubr.bf16.gmra.mrb[0].mxu0 %v881
    %v957 = vpop.f32.mrb[0].mxu0
    %v958 = vadd.f32 0.0, %v957
    %v959 = vpop.f32.mrb[0].mxu0
    %v960 = vpop.f32.mrb[0].mxu0
    %v961 = vadd.f32 0.0, %v960
    %v962 = vpop.f32.mrb[0].mxu0
    %963 = vmatprep.mubr.bf16.mxu0 0
    %964 = vmatmul.mubr.bf16.gmra.mrb[0].mxu0 %v884
    %v965 = vpop.f32.mrb[0].mxu0
    %v966 = vadd.f32 0.0, %v965
    %v967 = vpop.f32.mrb[0].mxu0
    %v968 = vpop.f32.mrb[0].mxu0
    %v969 = vadd.f32 0.0, %v968
    %v970 = vpop.f32.mrb[0].mxu0
    %971 = vmatprep.mubr.bf16.mxu0 0
    %972 = vmatmul.mubr.bf16.gmra.mrb[0].mxu0 %v887
    %v973 = vpop.f32.mrb[0].mxu0
    %v974 = vadd.f32 0.0, %v973
    %v975 = vpop.f32.mrb[0].mxu0
    %v976 = vpop.f32.mrb[0].mxu0
    %v977 = vadd.f32 0.0, %v976
    %v978 = vpop.f32.mrb[0].mxu0
    %979 = vmatprep.mubr.bf16.mxu0 0
    %980 = vmatmul.mubr.bf16.gmra.mrb[0].mxu0 %v890
    %v981 = vpop.f32.mrb[0].mxu0
    %v982 = vadd.f32 0.0, %v981
    %v983 = vpop.f32.mrb[0].mxu0
    %v984 = vpop.f32.mrb[0].mxu0
    %v985 = vadd.f32 0.0, %v984
    %v986 = vpop.f32.mrb[0].mxu0
    %987 = vmatprep.mubr.bf16.mxu0 0
    %988 = vmatmul.mubr.bf16.gmra.mrb[0].mxu0 %v893
    %v989 = vpop.f32.mrb[0].mxu0
    %v990 = vadd.f32 0.0, %v989
    %v991 = vpop.f32.mrb[0].mxu0
    %v992 = vpop.f32.mrb[0].mxu0
    %v993 = vadd.f32 0.0, %v992
    %v994 = vpop.f32.mrb[0].mxu0
    %995 = vmatprep.mubr.bf16.mxu0 0
    %996 = vmatmul.mubr.bf16.gmra.mrb[0].mxu0 %v896
    %v997 = vpop.f32.mrb[0].mxu0
    %v998 = vadd.f32 0.0, %v997
    %v999 = vpop.f32.mrb[0].mxu0
    %v1000 = vpop.f32.mrb[0].mxu0
    %v1001 = vadd.f32 0.0, %v1000
    %v1002 = vpop.f32.mrb[0].mxu0
    %1003 = vmatprep.mubr.bf16.mxu0 0
    %1004 = vmatmul.mubr.bf16.gmra.mrb[0].mxu0 %v899
    %v1005 = vpop.f32.mrb[0].mxu0
    %v1006 = vadd.f32 0.0, %v1005
    %v1007 = vpop.f32.mrb[0].mxu0
    %v1008 = vpop.f32.mrb[0].mxu0
    %v1009 = vadd.f32 0.0, %v1008
    %v1010 = vpop.f32.mrb[0].mxu0
    %1011 = vmatprep.mubr.bf16.mxu0 0
    %1012 = vmatmul.mubr.bf16.gmra.mrb[0].mxu0 %v902
    %v1013 = vpop.f32.mrb[0].mxu0
    %v1014 = vadd.f32 0.0, %v1013
    %v1015 = vpop.f32.mrb[0].mxu0
    %v1016 = vpop.f32.mrb[0].mxu0
    %v1017 = vadd.f32 0.0, %v1016
    %v1018 = vpop.f32.mrb[0].mxu0
    %1019 = vmatprep.mubr.bf16.mxu0 0
    %1020 = vmatmul.mubr.bf16.gmra.mrb[0].mxu0 %v905
    %v1021 = vpop.f32.mrb[0].mxu0
    %v1022 = vadd.f32 0.0, %v1021
    %v1023 = vpop.f32.mrb[0].mxu0
    %v1024 = vpop.f32.mrb[0].mxu0
    %v1025 = vadd.f32 0.0, %v1024
    %v1026 = vpop.f32.mrb[0].mxu0
    %1027 = vdwg.mxu0
    %v1028 = vmax.f32 %v774, %v942
    %v1029 = vmax.f32 %v775, %v945
    %v1030 = vmax.f32 %v776, %v950
    %v1031 = vmax.f32 %v777, %v953
    %v1032 = vmax.f32 %v778, %v958
    %v1033 = vmax.f32 %v779, %v961
    %v1034 = vmax.f32 %v780, %v966
    %v1035 = vmax.f32 %v781, %v969
    %v1036 = vmax.f32 %v782, %v974
    %v1037 = vmax.f32 %v783, %v977
    %v1038 = vmax.f32 %v784, %v982
    %v1039 = vmax.f32 %v785, %v985
    %v1040 = vmax.f32 %v786, %v990
    %v1041 = vmax.f32 %v787, %v993
    %v1042 = vmax.f32 %v788, %v998
    %v1043 = vmax.f32 %v789, %v1001
    %v1044 = vmax.f32 %v790, %v1006
    %v1045 = vmax.f32 %v791, %v1009
    %v1046 = vmax.f32 %v792, %v1014
    %v1047 = vmax.f32 %v793, %v1017
    %v1048 = vmax.f32 %v794, %v1022
    %v1049 = vmax.f32 %v795, %v1025
    %v1050 = vld [vmem:[%s2] sm:$0x1]
    %v1052 = vlaneseq
    %v1053 = vshrl.u32 %v1052, 7
    %v1054 = vsub.s32 0, %v1053
    %v1055 = vrot.slane %v1050, %v1054
    %v1057 = vadd.f32 %v1028, %v1055
    %v1058 = vadd.f32 %v1029, %v1055
    %v1059 = vadd.f32 %v1030, %v1055
    %v1060 = vadd.f32 %v1031, %v1055
    %v1061 = vadd.f32 %v1032, %v1055
    %v1062 = vadd.f32 %v1033, %v1055
    %v1063 = vadd.f32 %v1034, %v1055
    %v1064 = vadd.f32 %v1035, %v1055
    %v1065 = vadd.f32 %v1036, %v1055
    %v1066 = vadd.f32 %v1037, %v1055
    %v1067 = vadd.f32 %v1038, %v1055
    %v1068 = vadd.f32 %v1039, %v1055
    %v1069 = vadd.f32 %v1040, %v1055
    %v1070 = vadd.f32 %v1041, %v1055
    %v1071 = vadd.f32 %v1042, %v1055
    %v1072 = vadd.f32 %v1043, %v1055
    %v1073 = vadd.f32 %v1044, %v1055
    %v1074 = vadd.f32 %v1045, %v1055
    %v1075 = vadd.f32 %v1046, %v1055
    %v1076 = vadd.f32 %v1047, %v1055
    %v1077 = vadd.f32 %v1048, %v1055
    %v1078 = vadd.f32 %v1049, %v1055
    %v1079 = vmax.f32 %v1057, 0.0
    %v1080 = vmax.f32 %v1058, 0.0
    %v1081 = vmax.f32 %v1059, 0.0
    %v1082 = vmax.f32 %v1060, 0.0
    %v1083 = vmax.f32 %v1061, 0.0
    %v1084 = vmax.f32 %v1062, 0.0
    %v1085 = vmax.f32 %v1063, 0.0
    %v1086 = vmax.f32 %v1064, 0.0
    %v1087 = vmax.f32 %v1065, 0.0
    %v1088 = vmax.f32 %v1066, 0.0
    %v1089 = vmax.f32 %v1067, 0.0
    %v1090 = vmax.f32 %v1068, 0.0
    %v1091 = vmax.f32 %v1069, 0.0
    %v1092 = vmax.f32 %v1070, 0.0
    %v1093 = vmax.f32 %v1071, 0.0
    %v1094 = vmax.f32 %v1072, 0.0
    %v1095 = vmax.f32 %v1073, 0.0
    %v1096 = vmax.f32 %v1074, 0.0
    %v1097 = vmax.f32 %v1075, 0.0
    %v1098 = vmax.f32 %v1076, 0.0
    %v1099 = vmax.f32 %v1077, 0.0
    %v1100 = vmax.f32 %v1078, 0.0
    %v1101 = vpack.c.bf16 %v1080, %v1079
    %v1102 = vpack.c.bf16 %v1082, %v1081
    %v1103 = vpack.c.bf16 %v1084, %v1083
    %v1104 = vpack.c.bf16 %v1086, %v1085
    %v1105 = vpack.c.bf16 %v1088, %v1087
    %v1106 = vpack.c.bf16 %v1090, %v1089
    %v1107 = vpack.c.bf16 %v1092, %v1091
    %v1108 = vpack.c.bf16 %v1094, %v1093
    %v1109 = vpack.c.bf16 %v1096, %v1095
    %v1110 = vpack.c.bf16 %v1098, %v1097
    %v1111 = vpack.c.bf16 %v1100, %v1099
    %v1123 = vunpack.c.l.b16 %v1101
    %v1124 = vunpack.c.h.b16 %v1101
    %v1125 = vunpack.c.l.b16 %v1102
    %v1126 = vunpack.c.h.b16 %v1102
    %v1127 = vunpack.c.l.b16 %v1103
    %v1128 = vunpack.c.h.b16 %v1103
    %v1129 = vunpack.c.l.b16 %v1104
    %v1130 = vunpack.c.h.b16 %v1104
    %v1131 = vunpack.c.l.b16 %v1105
    %v1132 = vunpack.c.h.b16 %v1105
    %v1133 = vunpack.c.l.b16 %v1106
    %v1134 = vunpack.c.h.b16 %v1106
    %v1135 = vunpack.c.l.b16 %v1107
    %v1136 = vunpack.c.h.b16 %v1107
    %v1137 = vunpack.c.l.b16 %v1108
    %v1138 = vunpack.c.h.b16 %v1108
    %v1139 = vunpack.c.l.b16 %v1109
    %v1140 = vunpack.c.h.b16 %v1109
    %v1141 = vunpack.c.l.b16 %v1110
    %v1142 = vunpack.c.h.b16 %v1110
    %v1143 = vunpack.c.l.b16 %v1111
    %v1144 = vunpack.c.h.b16 %v1111
    %v1145 = vpack.c.b16 %v1123, %v1123
    %v1146 = vpack.c.b16 %v1124, %v1124
    %v1147 = vpack.c.b16 %v1125, %v1125
    %v1148 = vpack.c.b16 %v1126, %v1126
    %v1149 = vpack.c.b16 %v1127, %v1127
    %v1150 = vpack.c.b16 %v1128, %v1128
    %v1151 = vpack.c.b16 %v1129, %v1129
    %v1152 = vpack.c.b16 %v1130, %v1130
    %v1153 = vpack.c.b16 %v1131, %v1131
    %v1154 = vpack.c.b16 %v1132, %v1132
    %v1155 = vpack.c.b16 %v1133, %v1133
    %v1156 = vpack.c.b16 %v1134, %v1134
    %v1157 = vpack.c.b16 %v1135, %v1135
    %v1158 = vpack.c.b16 %v1136, %v1136
    %v1159 = vpack.c.b16 %v1137, %v1137
    %v1160 = vpack.c.b16 %v1138, %v1138
    %v1161 = vpack.c.b16 %v1139, %v1139
    %v1162 = vpack.c.b16 %v1140, %v1140
    %v1163 = vpack.c.b16 %v1141, %v1141
    %v1164 = vpack.c.b16 %v1142, %v1142
    %v1165 = vpack.c.b16 %v1143, %v1143
    %v1166 = vpack.c.b16 %v1144, %v1144
    %1189 = vst [vmem:[#allocation2] sm:$0xf] %v1145
    %1190 = vst [vmem:[#allocation2 + $0x4] sm:$0xf] %v1146
    %1191 = vst [vmem:[#allocation2 + $0x8] sm:$0xf] %v1147
    %1192 = vst [vmem:[#allocation2 + $0xc] sm:$0xf] %v1148
    %1193 = vst [vmem:[#allocation2 + $0x10] sm:$0xf] %v1149
    %1194 = vst [vmem:[#allocation2 + $0x14] sm:$0xf] %v1150
    %1195 = vst [vmem:[#allocation2 + $0x18] sm:$0xf] %v1151
    %1196 = vst [vmem:[#allocation2 + $0x1c] sm:$0xf] %v1152
    %1197 = vst [vmem:[#allocation2 + $0x20] sm:$0xf] %v1153
    %1198 = vst [vmem:[#allocation2 + $0x24] sm:$0xf] %v1154
    %1199 = vst [vmem:[#allocation2 + $0x28] sm:$0xf] %v1155
    %1200 = vst [vmem:[#allocation2 + $0x2c] sm:$0xf] %v1156
    %1201 = vst [vmem:[#allocation2 + $0x30] sm:$0xf] %v1157
    %1202 = vst [vmem:[#allocation2 + $0x34] sm:$0xf] %v1158
    %1203 = vst [vmem:[#allocation2 + $0x38] sm:$0xf] %v1159
    %1204 = vst [vmem:[#allocation2 + $0x3c] sm:$0xf] %v1160
    %1205 = vst [vmem:[#allocation2 + $0x40] sm:$0xf] %v1161
    %1206 = vst [vmem:[#allocation2 + $0x44] sm:$0xf] %v1162
    %1207 = vst [vmem:[#allocation2 + $0x48] sm:$0xf] %v1163
    %1208 = vst [vmem:[#allocation2 + $0x4c] sm:$0xf] %v1164
    %1209 = vst [vmem:[#allocation2 + $0x50] sm:$0xf] %v1165
    %1210 = vst [vmem:[#allocation2 + $0x54] sm:$0xf] %v1166
    // Predicated region
    $region14: #{tpu_custom_call.1} parent=1 // pred_check
      _
    $region15: #{tpu_custom_call.1} parent=1 // pred_check_branch
      %1212 = sbr.rel (0) target = $region17
    $region16: #{tpu_custom_call.1} parent=1 // pred_region
      %s1214 = ssub.s32 1408, 1408
      %1215 = vsyncadd [#allocation3], %s1214
      %s1216 = sshll.u32 [#allocation2], 4
      %s1217 = int_to_ptr.vmem [resolvable:$true] %s1216
      %1222 = dma.vmem_to_hbm [thread:$0]  %s1217, 1408, %s3, [#allocation3], 64, 64, 4
    $region17: #{tpu_custom_call.1} parent=1 // pred_fallthru
      _
    // Predicated region
    $region18: #{tpu_custom_call.1} parent=1 // pred_check
      _
    $region19: #{tpu_custom_call.1} parent=1 // pred_check_branch
      %1224 = sbr.rel (0) target = $region21
    $region20: #{tpu_custom_call.1} parent=1 // pred_region
      %1225 = dma.done [#allocation3], 1408
    $region21: #{tpu_custom_call.1} parent=1 // pred_fallthru
      _
    %1226 = vsyncpa [#allocation3], 1

</llo_original>
